<compile_context>
chip_gen: v6e
topology: v6e:2x2x1
jax: 0.10.0
libtpu: 0.0.40
codegen_flags: <defaults>
</compile_context>

<pallas_src>
import functools

import jax
import jax.numpy as jnp
import numpy as np
from jax import lax
from jax.experimental import pallas as pl
from jax.experimental.pallas import tpu as pltpu


def _conv1x1_kernel(wb_ref, x_ref, o_ref, *, cin):
    """wb_ref: (out_dim, C+1) packed [W | bias]; x_ref: (nb, C, S); o_ref: (nb, out_dim, S)."""
    nb = x_ref.shape[0]
    S = x_ref.shape[2]
    out_dim = o_ref.shape[1]

    wb = wb_ref[...]                       # (out_dim, C+1), f32
    w = wb[:, :cin]                        # (out_dim, C)
    if w.dtype != x_ref.dtype:             # keep MXU path in the input dtype (e.g. bf16)
        w = w.astype(x_ref.dtype)
    # Hoist the bias lane-broadcast out of the batch loop (f32 accumulator dtype).
    bias_b = jnp.broadcast_to(wb[:, cin:].astype(jnp.float32), (out_dim, S))

    def body(i, carry):
        x = x_ref[i]                       # (C, S) — S = H*W dense on the lane axis
        y = jnp.dot(w, x, preferred_element_type=jnp.float32) + bias_b
        o_ref[i] = y.astype(o_ref.dtype)   # lane-dense store (last dim = H*W)
        return carry

    lax.fori_loop(0, nb, body, 0, unroll=bool(nb <= 4))


def fully_conv_forward(x_nchw, weight, bias, *, target_block_bytes=2 << 20):
    """x_nchw: (B, C, H, W); weight: (out_dim, C) == Conv2d.weight[..., 0, 0]; bias: (out_dim,).

    Returns (B, out_dim, H, W), matching the PyTorch module (output dtype = input dtype).
    """
    B, C, H, W = x_nchw.shape
    out_dim = weight.shape[0]
    S = H * W
    out_dtype = x_nchw.dtype

    x = x_nchw.reshape(B, C, S)                                        # free reshape, stays NCHW
    wb = jnp.concatenate([weight.astype(jnp.float32),
                          bias.astype(jnp.float32)[:, None]], axis=1)  # (out_dim, C+1): one DMA

    # --- nb sizing: ~target_block_bytes per x block, but keep >= 2 grid steps when B >= 2 ---
    itemsize = jnp.dtype(x.dtype).itemsize
    bytes_per_batch = C * S * itemsize
    nb_cap = max(1, target_block_bytes // bytes_per_batch)
    nb_cap = min(nb_cap, max(1, B // 2))          # pipelining on 1 TC + both TCs busy on v7x
    nb = 1
    for d in range(1, int(nb_cap) + 1):           # largest divisor of B -> no partial blocks
        if B % d == 0:
            nb = d
    grid = (B // nb,)

    # --- explicit VMEM budget: double-buffered x/out blocks + params + headroom ---
    x_blk = nb * C * S * itemsize
    o_blk = nb * out_dim * S * jnp.dtype(out_dtype).itemsize
    wb_bytes = int(wb.size) * 4
    vmem_limit = int(min(max(2 * (x_blk + o_blk) + wb_bytes + (4 << 20), 32 << 20), 64 << 20))

    kernel = functools.partial(_conv1x1_kernel, cin=C)
    out = pl.pallas_call(
        kernel,
        out_shape=jax.ShapeDtypeStruct((B, out_dim, S), out_dtype),
        grid=grid,
        in_specs=[
            pl.BlockSpec((out_dim, C + 1), lambda i: (0, 0)),   # packed params, resident
            pl.BlockSpec((nb, C, S), lambda i: (i, 0, 0)),      # x in native channels-first
        ],
        out_specs=pl.BlockSpec((nb, out_dim, S), lambda i: (i, 0, 0)),
        compiler_params=pltpu.CompilerParams(
            dimension_semantics=("parallel",),
            vmem_limit_bytes=vmem_limit,
        ),
    )(wb, x)

    return out.reshape(B, out_dim, H, W)                        # free reshape back to NCHW


def ref_forward(x_nchw, weight, bias):
    """Pure-JAX reference for nn.Conv2d(c, out_dim, 1)."""
    out = jnp.einsum("oc,bchw->bohw", weight.astype(jnp.float32),
                     x_nchw.astype(jnp.float32), precision=lax.Precision.HIGHEST)
    return (out + bias.astype(jnp.float32)[None, :, None, None]).astype(x_nchw.dtype)


if __name__ == "__main__":
    key = jax.random.PRNGKey(0)
    k1, k2, k3, k4 = jax.random.split(key, 4)

    # FullyConvLayer(c=C, out_dim=OUT); input x: (B, C, H, W) like torch NCHW.
    B, C, H, W, OUT = 2, 8, 16, 16, 4
    weight = 0.2 * jax.random.normal(k1, (OUT, C), jnp.float32)   # Conv2d weight[..., 0, 0]
    bias = 0.1 * jax.random.normal(k2, (OUT,), jnp.float32)
    x = jax.random.normal(k3, (B, C, H, W), jnp.float32)

    ref = jax.block_until_ready(ref_forward(x, weight, bias))
    out = jax.block_until_ready(fully_conv_forward(x, weight, bias))
    assert out.shape == ref.shape == (B, OUT, H, W)
    np.testing.assert_allclose(np.asarray(out), np.asarray(ref), rtol=2e-3, atol=2e-3)

    # Second (still small) case exercising nb > 1 per grid step and the fori_loop path.
    B2 = 8
    x2 = jax.random.normal(k4, (B2, C, H, W), jnp.float32)
    ref2 = jax.block_until_ready(ref_forward(x2, weight, bias))
    out2 = jax.block_until_ready(fully_conv_forward(x2, weight, bias))
    np.testing.assert_allclose(np.asarray(out2), np.asarray(ref2), rtol=2e-3, atol=2e-3)

    print("KERNEL_OK")
</pallas_src>

<mosaic_0001>
module attributes {stable_mosaic.version = 11 : i64} {
  func.func @_conv1x1_kernel(%arg0: i32, %arg1: memref<4x9xf32, #tpu.memory_space<vmem>>, %arg2: memref<1x8x256xf32, #tpu.memory_space<vmem>>, %arg3: memref<1x4x256xf32, #tpu.memory_space<vmem>>) attributes {dimension_semantics = [#tpu.dimension_semantics<parallel>], iteration_bounds = array<i64: 2>, scalar_prefetch = 0 : i64, scratch_operands = 0 : i64, tpu.core_type = #tpu.core_type<tc>, window_params = [{pipeline_mode = #tpu.pipeline_mode<synchronous>, transform_indices = @transform_0, window_bounds = array<i64: 4, 9>}, {transform_indices = @transform_1, window_bounds = array<i64: 1, 8, 256>}, {transform_indices = @transform_2, window_bounds = array<i64: 1, 4, 256>}]} {
    %c0 = arith.constant 0 : index
    %c0_0 = arith.constant 0 : index
    %0 = vector.load %arg1[%c0, %c0_0] : memref<4x9xf32, #tpu.memory_space<vmem>>, vector<4x9xf32>
    %1 = vector.extract_strided_slice %0 {offsets = [0, 0], sizes = [4, 8], strides = [1, 1]} : vector<4x9xf32> to vector<4x8xf32>
    %2 = vector.extract_strided_slice %0 {offsets = [0, 8], sizes = [4, 1], strides = [1, 1]} : vector<4x9xf32> to vector<4x1xf32>
    %3 = vector.shape_cast %2 : vector<4x1xf32> to vector<4x1xf32>
    %4 = vector.broadcast %3 : vector<4x1xf32> to vector<4x256xf32>
    %c0_i32 = arith.constant 0 : i32
    %5 = arith.index_cast %c0_i32 : i32 to index
    %c0_1 = arith.constant 0 : index
    %c0_2 = arith.constant 0 : index
    %6 = vector.load %arg2[%5, %c0_1, %c0_2] : memref<1x8x256xf32, #tpu.memory_space<vmem>>, vector<1x8x256xf32>
    %7 = vector.shape_cast %6 : vector<1x8x256xf32> to vector<8x256xf32>
    %cst = arith.constant dense<0.000000e+00> : vector<4x256xf32>
    %8 = tpu.matmul %1, %7, %cst {dimension_numbers = #tpu.dot_dimension_numbers<[1], [0], [0], [1], [0, 0, 1, 1], [], []>} : vector<4x8xf32>, vector<8x256xf32>, vector<4x256xf32> -> vector<4x256xf32>
    %9 = arith.addf %8, %4 : vector<4x256xf32>
    %10 = arith.index_cast %c0_i32 : i32 to index
    %c0_3 = arith.constant 0 : index
    %c0_4 = arith.constant 0 : index
    %11 = vector.load %arg3[%10, %c0_3, %c0_4] : memref<1x4x256xf32, #tpu.memory_space<vmem>>, vector<1x4x256xf32>
    %12 = vector.shape_cast %11 : vector<1x4x256xf32> to vector<4x256xf32>
    %13 = vector.shape_cast %9 : vector<4x256xf32> to vector<1x4x256xf32>
    tpu.vector_store %arg3[%10, %c0_3, %c0_4], %13 {strides = array<i32>} : memref<1x4x256xf32, #tpu.memory_space<vmem>>, vector<1x4x256xf32>,
    %c1_i32 = arith.constant 1 : i32
    return
  }
  func.func @transform_0(%arg0: i32) -> (i32, i32) {
    %c0_i32 = arith.constant 0 : i32
    %c0_i32_0 = arith.constant 0 : i32
    %c0_i32_1 = arith.constant 0 : i32
    return %c0_i32, %c0_i32_0 : i32, i32
  }
  func.func @transform_1(%arg0: i32) -> (i32, i32, i32) {
    %c0_i32 = arith.constant 0 : i32
    %c0_i32_0 = arith.constant 0 : i32
    %c0_i32_1 = arith.constant 0 : i32
    return %arg0, %c0_i32, %c0_i32_0 : i32, i32, i32
  }
  func.func @transform_2(%arg0: i32) -> (i32, i32, i32) {
    %c0_i32 = arith.constant 0 : i32
    %c0_i32_0 = arith.constant 0 : i32
    %c0_i32_1 = arith.constant 0 : i32
    return %arg0, %c0_i32, %c0_i32_0 : i32, i32, i32
  }
}

</mosaic_0001>

<llo_original>
// kernel: tpu_custom_call.1
$region0: #{tpu_custom_call.1}
  #allocation0 [shape = 'u32[]', space=smem, size = 0x4, offset = 0x4, fixed_abs, tag = 'smem constant byte address 0x4 - core index']
  #allocation1 [shape = 'u32[144,128]{1,0:T(1,128)}', space=vmem, size = 0x12000, scoped, tag = 'internal scratch']
  %s0 = inlined_call_operand.hbm [shape: f32[4,9], index: 0, kind: input, shape index: {}]
  %s1 = inlined_call_operand.hbm [shape: f32[2,8,256], index: 1, kind: input, shape index: {}]
  %s2 = inlined_call_operand.hbm [shape: f32[2,4,256], index: 2, kind: output, shape index: {}]
  %s3 = sld [smem:[#allocation0]]
  $region49: #{tpu_custom_call.1} parent=0
    _
  %s5 = ssub.s32 1, %s3
  %s6 = scalar_select 0, %s5, %s3
  $region1: #{tpu_custom_call.1} parent=0
    #allocation2 [shape = 'u8[2048]{0}', space=vmem, size = 0x800, scoped, tag = 'input window, operand 0, single buffered']
    #allocation3 [shape = 's32[2]{0}', space=sflag, size = 0x8, scoped, tag = 'scoped memory for tpu_custom_call.1']
    #allocation4 [shape = 's32[2]{0}', space=sflag, size = 0x8, scoped, tag = 'scoped memory for tpu_custom_call.1']
    #allocation5 [shape = 'u8[16384]{0}', space=vmem, size = 0x4000, scoped, tag = 'input window, operand 1']
    #allocation6 [shape = 's32[2]{0}', space=sflag, size = 0x8, scoped, tag = 'scoped memory for tpu_custom_call.1']
    #allocation7 [shape = 'u8[8192]{0}', space=vmem, size = 0x2000, scoped, tag = 'output window, operand 0']
    %7 = vsyncpa [#allocation3], 0
    %8 = vsyncpa [#allocation6], 0
    %s9 = scalar_lea.sflag [#allocation6], 1
    %10 = vsyncpa %s9, 0
    %11 = vsyncpa [#allocation4], 0
    %s12 = scalar_lea.sflag [#allocation4], 1
    %13 = vsyncpa %s12, 0
    loop: start=0, step=1, limit=4
    $region2: #{tpu_custom_call.1} parent=1 // loop_pre_header
      _
    $region3: #{tpu_custom_call.1} parent=1 // loop_header
      %s15 = sphi 0, %s19
      %p16 = scmp.ge.s32.totalorder %s15, 4
      %s23 = sphi 0, %s23
      %s25 = sphi 0, %s23
      %s26 = sphi 0, %s25
      %s40 = sphi 0, %s26
      %s46 = sphi 0, %s48
      %s49 = sphi 0, %s46
      %s50 = sphi 0, %s49
      %s66 = sphi 0, %s50
      %s72 = sphi 0, %s74
      %s75 = sphi 0, %s72
      %s76 = sphi 0, %s75
      %s92 = sphi 0, %s76
    $region4: #{tpu_custom_call.1} parent=1 // loop_header_branch
      %18 = sbr.rel (%p16) target = $region8
    $region5: #{tpu_custom_call.1} parent=1 // loop_body
      %s20 = ssub.s32 %s15, 1
      %s21 = ssub.s32 %s15, 2
      %s22 = sadd.s32 %s15, 1
      %s24 = sadd.s32 %s23, 1
      %p27 = scmp.eq.s32.totalorder %s15, 1
      %p28 = scmp.ne.s32.totalorder %s23, %s25
      %p29 = scmp.eq.s32.totalorder %s15, 0
      %p30 = por %p28, %p29
      %p31 = scmp.ne.s32.totalorder %s23, %s25
      %p32 = scmp.eq.s32.totalorder %s20, 1
      %p33 = por %p31, %p32
      %p34 = scmp.ne.s32.totalorder %s25, %s26
      %p35 = scmp.eq.s32.totalorder %s20, 0
      %p36 = por %p34, %p35
      %p37 = scmp.ne.s32.totalorder %s25, %s26
      %p38 = scmp.eq.s32.totalorder %s21, 1
      %p39 = por %p37, %p38
      %p41 = scmp.ne.s32.totalorder %s26, %s40
      %p42 = scmp.eq.s32.totalorder %s21, 0
      %p43 = por %p41, %p42
      %s44 = ssub.s32 %s15, %s22
      %p45 = scmp.eq.s32.totalorder %s44, 0
      %s47 = sadd.s32 %s46, 1
      %s48 = scalar_select %p45, %s46, %s47
      %p51 = pneg %p45
      %p52 = scmp.eq.s32.totalorder %s15, 1
      %p53 = por %p51, %p52
      %p54 = scmp.ne.s32.totalorder %s46, %s49
      %p55 = scmp.eq.s32.totalorder %s15, 0
      %p56 = por %p54, %p55
      %p57 = scmp.ne.s32.totalorder %s46, %s49
      %p58 = scmp.eq.s32.totalorder %s20, 1
      %p59 = por %p57, %p58
      %p60 = scmp.ne.s32.totalorder %s49, %s50
      %p61 = scmp.eq.s32.totalorder %s20, 0
      %p62 = por %p60, %p61
      %p63 = scmp.ne.s32.totalorder %s49, %s50
      %p64 = scmp.eq.s32.totalorder %s21, 1
      %p65 = por %p63, %p64
      %p67 = scmp.ne.s32.totalorder %s50, %s66
      %p68 = scmp.eq.s32.totalorder %s21, 0
      %p69 = por %p67, %p68
      %s70 = ssub.s32 %s15, %s22
      %p71 = scmp.eq.s32.totalorder %s70, 0
      %s73 = sadd.s32 %s72, 1
      %s74 = scalar_select %p71, %s72, %s73
      %p77 = pneg %p71
      %p78 = scmp.eq.s32.totalorder %s15, 1
      %p79 = por %p77, %p78
      %p80 = scmp.ne.s32.totalorder %s72, %s75
      %p81 = scmp.eq.s32.totalorder %s15, 0
      %p82 = por %p80, %p81
      %p83 = scmp.ne.s32.totalorder %s72, %s75
      %p84 = scmp.eq.s32.totalorder %s20, 1
      %p85 = por %p83, %p84
      %p86 = scmp.ne.s32.totalorder %s75, %s76
      %p87 = scmp.eq.s32.totalorder %s20, 0
      %p88 = por %p86, %p87
      %p89 = scmp.ne.s32.totalorder %s75, %s76
      %p90 = scmp.eq.s32.totalorder %s21, 1
      %p91 = por %p89, %p90
      %p93 = scmp.ne.s32.totalorder %s76, %s92
      %p94 = scmp.eq.s32.totalorder %s21, 0
      %p95 = por %p93, %p94
      %p96 = scmp.le.s32.totalorder 1, %s15
      %p97 = scmp.lt.s32.totalorder %s15, 3
      %p98 = pnand %p96, %p97
      %p99 = pneg %p98
      // Predicated region
      $region9: #{tpu_custom_call.1} parent=5 // pred_check
        _
      $region10: #{tpu_custom_call.1} parent=5 // pred_check_branch
        %101 = sbr.rel (%p98) target = $region12
      $region11: #{tpu_custom_call.1} parent=5 // pred_region
        %s102 = ssub.s32 %s15, 1
        // Predicated region
        $region13: #{tpu_custom_call.1} parent=11 // pred_check
          %p103 = pneg %p36
        $region14: #{tpu_custom_call.1} parent=11 // pred_check_branch
          %105 = sbr.rel (%p103) target = $region16
        $region15: #{tpu_custom_call.1} parent=11 // pred_region
          %s107 = ssub.s32 64, 64
          %108 = vsyncadd [#allocation3], %s107
          %s110 = sshll.u32 [#allocation2], 4
          %s111 = int_to_ptr.vmem [resolvable:$true] %s110
          %113 = dma.hbm_to_vmem [thread:$0]  %s0, 64, %s111, [#allocation3]
        $region16: #{tpu_custom_call.1} parent=11 // pred_fallthru
          _
      $region12: #{tpu_custom_call.1} parent=5 // pred_fallthru
        _
      %p114 = scmp.lt.s32.totalorder %s15, 2
      // Predicated region
      $region17: #{tpu_custom_call.1} parent=5 // pred_check
        %p115 = pneg %p114
      $region18: #{tpu_custom_call.1} parent=5 // pred_check_branch
        %117 = sbr.rel (%p115) target = $region20
      $region19: #{tpu_custom_call.1} parent=5 // pred_region
        // Predicated region
        $region21: #{tpu_custom_call.1} parent=19 // pred_check
          %p118 = pneg %p56
        $region22: #{tpu_custom_call.1} parent=19 // pred_check_branch
          %120 = sbr.rel (%p118) target = $region24
        $region23: #{tpu_custom_call.1} parent=19 // pred_region
          %s121 = sand.u32 %s46, 1
          %s122 = scalar_lea.sflag [#allocation6], %s121
          %s123 = sand.u32 %s46, 1
          %s124 = smul.addr %s123, 16
          %s125 = scalar_lea.vmem [#allocation5], %s124
          %s127 = ssub.s32 256, 256
          %128 = vsyncadd %s122, %s127
          %s129 = smul.addr %s15, 2
          %s130 = smul.addr %s129, 128
          %s131 = scalar_lea.hbm %s1, %s130
          %s133 = sshll.u32 %s125, 4
          %s134 = int_to_ptr.vmem [resolvable:$true] %s133
          %136 = dma.hbm_to_vmem [thread:$0]  %s131, 256, %s134, %s122
        $region24: #{tpu_custom_call.1} parent=19 // pred_fallthru
          _
      $region20: #{tpu_custom_call.1} parent=5 // pred_fallthru
        _
      %p137 = scmp.le.s32.totalorder 1, %s15
      %p138 = scmp.lt.s32.totalorder %s15, 3
      %p139 = pnand %p137, %p138
      %p140 = pneg %p139
      // Predicated region
      $region25: #{tpu_custom_call.1} parent=5 // pred_check
        _
      $region26: #{tpu_custom_call.1} parent=5 // pred_check_branch
        %142 = sbr.rel (%p139) target = $region28
      $region27: #{tpu_custom_call.1} parent=5 // pred_region
        %s143 = ssub.s32 %s15, 1
        // Predicated region
        $region29: #{tpu_custom_call.1} parent=27 // pred_check
          %p144 = pneg %p36
        $region30: #{tpu_custom_call.1} parent=27 // pred_check_branch
          %146 = sbr.rel (%p144) target = $region32
        $region31: #{tpu_custom_call.1} parent=27 // pred_region
          %147 = dma.done [#allocation3], 64
        $region32: #{tpu_custom_call.1} parent=27 // pred_fallthru
          _
        %s148 = sand.u32 %s49, 1
        %s149 = scalar_lea.sflag [#allocation6], %s148
        %s150 = sand.u32 %s49, 1
        %s151 = smul.addr %s150, 16
        %s152 = scalar_lea.vmem [#allocation5], %s151
        // Predicated region
        $region33: #{tpu_custom_call.1} parent=27 // pred_check
          %p153 = pneg %p62
        $region34: #{tpu_custom_call.1} parent=27 // pred_check_branch
          %155 = sbr.rel (%p153) target = $region36
        $region35: #{tpu_custom_call.1} parent=27 // pred_region
          %156 = dma.done %s149, 256
        $region36: #{tpu_custom_call.1} parent=27 // pred_fallthru
          _
        %p157 = pneg %p36
        %p158 = pneg %p33
        %s159 = sand.u32 %s49, 1
        %s160 = scalar_lea.sflag [#allocation6], %s159
        %s161 = sand.u32 %s49, 1
        %s162 = smul.addr %s161, 16
        %s163 = scalar_lea.vmem [#allocation5], %s162
        %p164 = pneg %p62
        %p165 = pneg %p59
        %p166 = pneg %p88
        %p167 = pneg %p85
        %s168 = sand.u32 %s75, 1
        %s169 = scalar_lea.sflag [#allocation4], %s168
        %s170 = sand.u32 %s75, 1
        %s171 = smul.addr %s170, 8
        %s172 = scalar_lea.vmem [#allocation7], %s171
        %v173 = vld [vmem:[#allocation2] sm:$0xf]
        %175 = vset.pattern.permute.xlu0 8
        %176 = vperm.xlu0 %175, %v173
        %v177 = vpop.permute.xlu0 %176
        %v179 = vld [vmem:[%s152] sm:$0xff]
        %v180 = vld [vmem:[%s152 + $0x8] sm:$0xff]
        %vm181 = vcmask 64512
        %v182 = vsel %vm181, %v173, 0
        %184 = vmatprep.subr.mxu0 0.0
        %185 = vmatpush1.msra.mxu0 0.0
        %186 = vmatprep.subr.mxu0 0.0
        %187 = vmatpush1.msra.mxu0 0.0
        %188 = vmatprep.subr.mxu0 0.0
        %189 = vmatpush1.msra.mxu0 0.0
        %190 = vmatprep.subr.mxu0 0.0
        %191 = vmatpush1.msra.mxu0 0.0
        %192 = vmatprep.subr.mxu0 0.0
        %193 = vmatpush1.msra.mxu0 0.0
        %194 = vmatprep.subr.mxu0 0.0
        %195 = vmatpush1.msra.mxu0 0.0
        %196 = vmatprep.subr.mxu0 0.0
        %197 = vmatpush1.msra.mxu0 0.0
        %198 = vmatprep.subr.mxu0 0.0
        %199 = vmatpush1.msra.mxu0 0.0
        %200 = vmatprep.subr.mxu0 0.0
        %201 = vmatpush1.msra.mxu0 0.0
        %202 = vmatprep.subr.mxu0 0.0
        %203 = vmatpush1.msra.mxu0 0.0
        %204 = vmatprep.subr.mxu0 0.0
        %205 = vmatpush1.msra.mxu0 0.0
        %206 = vmatprep.subr.mxu0 0.0
        %207 = vmatpush1.msra.mxu0 0.0
        %208 = vmatprep.subr.mxu0 0.0
        %209 = vmatpush1.msra.mxu0 0.0
        %210 = vmatprep.subr.mxu0 0.0
        %211 = vmatpush1.msra.mxu0 0.0
        %212 = vmatprep.subr.mxu0 0.0
        %213 = vmatpush1.msra.mxu0 0.0
        %214 = vmatprep.subr.mxu0 %v180
        %215 = vmatpush1.msra.mxu0 %v179
        %216 = vmatprep.subr.mxu0 0.0
        %217 = vmatpush2.msra.mxu0 0.0
        %218 = vmatprep.subr.mxu0 0.0
        %219 = vmatpush2.msra.mxu0 0.0
        %220 = vmatprep.subr.mxu0 0.0
        %221 = vmatpush2.msra.mxu0 0.0
        %222 = vmatprep.subr.mxu0 0.0
        %223 = vmatpush2.msra.mxu0 0.0
        %224 = vmatprep.subr.mxu0 0.0
        %225 = vmatpush2.msra.mxu0 0.0
        %226 = vmatprep.subr.mxu0 0.0
        %227 = vmatpush2.msra.mxu0 0.0
        %228 = vmatprep.subr.mxu0 0.0
        %229 = vmatpush2.msra.mxu0 0.0
        %230 = vmatprep.subr.mxu0 0.0
        %231 = vmatpush2.msra.mxu0 0.0
        %232 = vmatprep.subr.mxu0 0.0
        %233 = vmatpush2.msra.mxu0 0.0
        %234 = vmatprep.subr.mxu0 0.0
        %235 = vmatpush2.msra.mxu0 0.0
        %236 = vmatprep.subr.mxu0 0.0
        %237 = vmatpush2.msra.mxu0 0.0
        %238 = vmatprep.subr.mxu0 0.0
        %239 = vmatpush2.msra.mxu0 0.0
        %240 = vmatprep.subr.mxu0 0.0
        %241 = vmatpush2.msra.mxu0 0.0
        %242 = vmatprep.subr.mxu0 0.0
        %243 = vmatpush2.msra.mxu0 0.0
        %244 = vmatprep.subr.mxu0 0.0
        %245 = vmatpush2.msra.mxu0 0.0
        %246 = vmatprep.subr.mxu0 0.0
        %247 = vmatpush2.msra.mxu0 0.0
        %248 = vmatprep.mubr.f32.mxu0 0.0
        %249 = vmatmul.mubr.f32.gmra.mxu0 %v182
        %v250 = vpop.f32.mrf.mxu0
        %v251 = vadd.f32 %v177, %v250
        %v252 = vpop.f32.mrf.mxu0
        %v253 = vadd.f32 %v177, %v252
        %254 = vdwg.mxu0
        %v257 = vcombine.low %v251, %v253
        %259 = vst [vmem:[%s172] sm:$0xff] %v257
        %s260 = sand.u32 %s75, 1
        %s261 = scalar_lea.sflag [#allocation4], %s260
        %s262 = sand.u32 %s75, 1
        %s263 = smul.addr %s262, 8
        %s264 = scalar_lea.vmem [#allocation7], %s263
        // Predicated region
        $region37: #{tpu_custom_call.1} parent=27 // pred_check
          %p265 = pneg %p85
        $region38: #{tpu_custom_call.1} parent=27 // pred_check_branch
          %267 = sbr.rel (%p265) target = $region40
        $region39: #{tpu_custom_call.1} parent=27 // pred_region
          %s269 = ssub.s32 128, 128
          %270 = vsyncadd %s261, %s269
          %s271 = smul.addr %s20, 2
          %s272 = smul.addr %s271, 64
          %s273 = scalar_lea.hbm %s2, %s272
          %s275 = sshll.u32 %s264, 4
          %s276 = int_to_ptr.vmem [resolvable:$true] %s275
          %278 = dma.vmem_to_hbm [thread:$0]  %s276, 128, %s273, %s261
        $region40: #{tpu_custom_call.1} parent=27 // pred_fallthru
          _
      $region28: #{tpu_custom_call.1} parent=5 // pred_fallthru
        _
      %p279 = scmp.le.s32.totalorder 2, %s15
      // Predicated region
      $region41: #{tpu_custom_call.1} parent=5 // pred_check
        %p280 = pneg %p279
      $region42: #{tpu_custom_call.1} parent=5 // pred_check_branch
        %282 = sbr.rel (%p280) target = $region44
      $region43: #{tpu_custom_call.1} parent=5 // pred_region
        %s283 = ssub.s32 %s15, 2
        // Predicated region
        $region45: #{tpu_custom_call.1} parent=43 // pred_check
          %p284 = pneg %p91
        $region46: #{tpu_custom_call.1} parent=43 // pred_check_branch
          %286 = sbr.rel (%p284) target = $region48
        $region47: #{tpu_custom_call.1} parent=43 // pred_region
          %s287 = sand.u32 %s76, 1
          %s288 = scalar_lea.sflag [#allocation4], %s287
          %s289 = sand.u32 %s76, 1
          %s290 = smul.addr %s289, 8
          %s291 = scalar_lea.vmem [#allocation7], %s290
          %292 = dma.done %s288, 128
        $region48: #{tpu_custom_call.1} parent=43 // pred_fallthru
          _
      $region44: #{tpu_custom_call.1} parent=5 // pred_fallthru
        _
    $region6: #{tpu_custom_call.1} parent=1 // loop_footer
      %s19 = sadd.s32 1, %s15
    $region7: #{tpu_custom_call.1} parent=1 // loop_footer_branch
      %14 = sbr.rel target = $region3
    $region8: #{tpu_custom_call.1} parent=1 // loop_exit
      _
    %293 = vsyncpa [#allocation3], 1
    %s294 = scalar_lea.sflag [#allocation3], 1
    %295 = vsyncpa %s294, 1
    %296 = vsyncpa [#allocation6], 1
    %s297 = scalar_lea.sflag [#allocation6], 1
    %298 = vsyncpa %s297, 1
    %299 = vsyncpa [#allocation4], 1
    %s300 = scalar_lea.sflag [#allocation4], 1
    %301 = vsyncpa %s300, 1

</llo_original>
